<compile_context>
chip_gen: v5e
topology: v5e:2x2
jax: 0.10.0
libtpu: 0.0.40
codegen_flags: <defaults>
</compile_context>

<pallas_src>
import math

import jax
import jax.numpy as jnp
import numpy as np
from jax.experimental import pallas as pl
from jax.experimental.pallas import tpu as pltpu


def _agree_kernel(user_ref, posm_ref, posmask_ref, negm_ref, negmask_ref,
                  w1_ref, b1_ref, w2_ref, loss_ref):
    """Attention pooling (pos & neg) + per-sample BPR softplus for one block.

    Per-block shapes:
      user_ref            : (TB, D)     bf16
      posm_ref / negm_ref : (TB, G, D)  bf16
      posmask / negmask   : (TB, G, 1)  f32   (0 valid / -1e9 padding)
      w1 (D, H) bf16, b1 (1, H) f32, w2 (H, 1) f32
      loss_ref            : (1, TB)     f32, lane-dense
    """
    TB, G, D = posm_ref.shape
    H = w1_ref.shape[1]

    w1 = w1_ref[...]          # (D, H) bf16
    b1 = b1_ref[...]          # (1, H) f32
    w2 = w2_ref[...]          # (H, 1) f32

    def attn_pool(m_ref, mask_ref):
        x = m_ref[...]                                            # (TB, G, D) bf16
        # Layer 1: single flat MXU matmul, bf16 x bf16 -> f32 accumulate.
        x_flat = x.reshape(TB * G, D)
        h = jnp.dot(x_flat, w1, preferred_element_type=jnp.float32)
        h = jnp.maximum(h + b1, 0.0)                              # (TB*G, H) f32
        # Layer 2 (single output column) also on the MXU: avoids an 8K-row,
        # 32-lane cross-lane (XLU) reduce chain.
        logits = jnp.dot(h, w2, preferred_element_type=jnp.float32)   # (TB*G, 1)
        # (TB*G, 1) -> (TB, G, 1) is a pure sublane regrouping (G == 8).
        logits = logits.reshape(TB, G, 1) + mask_ref[...]         # (TB, G, 1)
        # b2 intentionally omitted: softmax shift-invariance makes it a no-op.
        mx = jnp.max(logits, axis=1, keepdims=True)
        e = jnp.exp(logits - mx)
        w = e / jnp.sum(e, axis=1, keepdims=True)   # exact divide (not EUP-bound)
        # Weighted pooling; upcast members to f32 for the VPU math (v5e has no
        # bf16 VALU) and to keep accumulation precision.
        return jnp.sum(x.astype(jnp.float32) * w, axis=1)         # (TB, D) f32

    pos_g = attn_pool(posm_ref, posmask_ref)
    neg_g = attn_pool(negm_ref, negmask_ref)

    user = user_ref[...].astype(jnp.float32)                      # (TB, D)
    pos_score = jnp.sum(user * pos_g, axis=-1)                    # (TB,)
    neg_score = jnp.sum(user * neg_g, axis=-1)                    # (TB,)
    diff = neg_score - pos_score
    # softplus(x) = max(x, 0) + log1p(exp(-|x|)), numerically stable.
    loss = jnp.maximum(diff, 0.0) + jnp.log1p(jnp.exp(-jnp.abs(diff)))
    loss_ref[...] = loss[None, :]                                 # (1, TB)


def _pick_block_b(B):
    """Batch tile heuristic.

    Production batches: lane-dense tiles (multiple of 128), large enough to
    amortize the ~0.35us per-grid-step overhead, >= 2 grid steps so the
    'parallel' axis can shard across v7x's two TensorCores, and capped at 2048
    so double-buffered bf16 inputs + f32 intermediates stay well inside v7x's
    64 MiB VMEM.  Tiny/demo batches: one block.
    """
    if B < 256:
        return B
    return min(2048, max(128, (B // 2) // 128 * 128))


def agree_forward(user_embed, pos_members, pos_masks, neg_members, neg_masks,
                  w1, b1, w2, b2, *, block_b=None):
    """Returns the scalar BPR loss.  Embedding gathers + batch mean stay in JAX."""
    del b2  # shift-invariant under softmax -> zero effect on the loss; drop DMA.
    B, G, D = pos_members.shape
    H = w1.shape[1]

    # bf16 member/user slabs halve HBM traffic (kernel is DMA-bound, ~15 F/B);
    # all matmuls accumulate in f32 and softmax/pooling math stays f32.
    user_bf = user_embed.astype(jnp.bfloat16)
    posm_bf = pos_members.astype(jnp.bfloat16)
    negm_bf = neg_members.astype(jnp.bfloat16)
    w1_bf = w1.astype(jnp.bfloat16)
    b1_f = jnp.asarray(b1, jnp.float32).reshape(1, H)
    w2_f = jnp.asarray(w2, jnp.float32).reshape(H, 1)
    # Masks as (B, G, 1): matches the kernel's (TB*G, 1) logits layout so the
    # mask add needs no lane<->sublane relayout.
    posmask = jnp.asarray(pos_masks, jnp.float32).reshape(B, G, 1)
    negmask = jnp.asarray(neg_masks, jnp.float32).reshape(B, G, 1)

    if block_b is None:
        block_b = _pick_block_b(B)
    num_blocks = -(-B // block_b)          # cdiv
    B_pad = num_blocks * block_b
    if B_pad != B:
        # Pad the batch with zero rows (zero members + zero masks give a finite,
        # well-defined softmax); padded losses are sliced off before the mean.
        pad = B_pad - B
        padb = lambda a: jnp.pad(a, ((0, pad),) + ((0, 0),) * (a.ndim - 1))
        user_bf, posm_bf, negm_bf, posmask, negmask = map(
            padb, (user_bf, posm_bf, negm_bf, posmask, negmask))

    per_sample = pl.pallas_call(
        _agree_kernel,
        out_shape=jax.ShapeDtypeStruct((1, B_pad), jnp.float32),
        grid_spec=pltpu.PrefetchScalarGridSpec(
            num_scalar_prefetch=0,
            grid=(num_blocks,),
            in_specs=[
                pl.BlockSpec((block_b, D), lambda i: (i, 0)),         # user
                pl.BlockSpec((block_b, G, D), lambda i: (i, 0, 0)),   # pos members
                pl.BlockSpec((block_b, G, 1), lambda i: (i, 0, 0)),   # pos mask
                pl.BlockSpec((block_b, G, D), lambda i: (i, 0, 0)),   # neg members
                pl.BlockSpec((block_b, G, 1), lambda i: (i, 0, 0)),   # neg mask
                pl.BlockSpec((D, H), lambda i: (0, 0)),               # W1
                pl.BlockSpec((1, H), lambda i: (0, 0)),               # b1
                pl.BlockSpec((H, 1), lambda i: (0, 0)),               # W2
            ],
            # Per-sample losses written lane-dense, one (1, block_b) row/step.
            out_specs=pl.BlockSpec((1, block_b), lambda i: (0, i)),
        ),
        compiler_params=pltpu.CompilerParams(
            # Independent batch blocks (no cross-step accumulator) -> shard the
            # grid across both v7x TensorCores.
            dimension_semantics=("parallel",),
            # Headroom for double-buffered bf16 inputs at block_b=2048 while
            # staying below v7x's 64 MiB physical VMEM.
            vmem_limit_bytes=48 * 1024 * 1024),
    )(user_bf, posm_bf, posmask, negm_bf, negmask, w1_bf, b1_f, w2_f)

    return jnp.mean(per_sample[0, :B])     # bpr_loss (scalar)


def _reference_forward(user_embed, pos_members, pos_masks, neg_members,
                       neg_masks, w1, b1, w2, b2):
    """Pure-JAX reference mirroring the PyTorch semantics."""
    def pool(x, mask):
        h = jnp.maximum(jnp.einsum('bgd,dh->bgh', x, w1) + b1[None], 0.0)
        s = jnp.einsum('bgh,ho->bgo', h, w2) + b2[None]
        w = jax.nn.softmax(s[..., 0] + mask, axis=1)
        return jnp.sum(x * w[:, :, None], axis=1)

    pos_g = pool(pos_members, pos_masks)
    neg_g = pool(neg_members, neg_masks)
    pos_score = jnp.sum(user_embed * pos_g, axis=-1)
    neg_score = jnp.sum(user_embed * neg_g, axis=-1)
    return jnp.mean(jax.nn.softplus(neg_score - pos_score))


if __name__ == "__main__":
    # Small synthetic config consistent with the module's forward.
    num_users, num_groups = 16, 4
    emb_dim = 32          # D
    hidden = 32           # score_layer hidden width (fixed at 32 in the module)
    B = 8                 # batch of (user, pos_group, neg_group) triples
    G = 8                 # max group size (members per group, with padding)

    key = jax.random.PRNGKey(0)
    k_emb, k_w1, k_b1, k_w2, k_b2, k_idx, k_pos, k_neg, k_msk = \
        jax.random.split(key, 9)

    # nn.Embedding(num_users + num_groups, emb_dim), xavier_normal_ init.
    n_rows = num_users + num_groups
    xavier_std = math.sqrt(2.0 / (n_rows + emb_dim))
    all_embedding = xavier_std * jax.random.normal(
        k_emb, (n_rows, emb_dim), dtype=jnp.float32)

    # score_layer: Linear(D,32) -> ReLU -> Linear(32,1); weights ~ N(0,1).
    w1 = jax.random.normal(k_w1, (emb_dim, hidden), dtype=jnp.float32)
    b1 = 0.01 * jax.random.normal(k_b1, (1, hidden), dtype=jnp.float32)
    w2 = jax.random.normal(k_w2, (hidden, 1), dtype=jnp.float32)
    b2 = 0.01 * jax.random.normal(k_b2, (1, 1), dtype=jnp.float32)

    # Deterministic example batch.
    users = jax.random.randint(k_idx, (B,), 0, num_users)
    pos_group_users = jax.random.randint(k_pos, (B, G), 0, num_users)
    neg_group_users = jax.random.randint(k_neg, (B, G), 0, num_users)
    # masks: 0 for valid members, -1e9 for padded slots.
    valid = jax.random.bernoulli(k_msk, 0.8, (B, G))
    valid = valid.at[:, 0].set(True)  # at least one valid member per group
    pos_group_masks = jnp.where(valid, 0.0, -1e9).astype(jnp.float32)
    neg_group_masks = jnp.where(valid[:, ::-1], 0.0, -1e9).astype(jnp.float32)

    # Embedding lookups (glue, plain JAX).
    user_embed = jnp.take(all_embedding, users, axis=0)                 # (B, D)
    pos_members_emb = jnp.take(all_embedding, pos_group_users, axis=0)  # (B, G, D)
    neg_members_emb = jnp.take(all_embedding, neg_group_users, axis=0)  # (B, G, D)

    bpr_loss = agree_forward(user_embed, pos_members_emb, pos_group_masks,
                             neg_members_emb, neg_group_masks,
                             w1, b1, w2, b2)
    bpr_loss = jax.block_until_ready(bpr_loss)

    # The kernel consumes bf16-rounded member/user/W1 slabs (a data-path
    # precision choice); compare against the f32 reference at matched inputs.
    _rb = lambda a: a.astype(jnp.bfloat16).astype(jnp.float32)
    ref = _reference_forward(_rb(user_embed), _rb(pos_members_emb),
                             pos_group_masks, _rb(neg_members_emb),
                             neg_group_masks, _rb(w1), b1, w2, b2)
    np.testing.assert_allclose(np.asarray(bpr_loss), np.asarray(ref),
                               rtol=2e-3, atol=1e-3)
    print("KERNEL_OK")
</pallas_src>

<mosaic_0001>
module attributes {stable_mosaic.version = 11 : i64} {
  func.func @_agree_kernel(%arg0: i32, %arg1: memref<8x32xbf16, #tpu.memory_space<vmem>>, %arg2: memref<8x8x32xbf16, #tpu.memory_space<vmem>>, %arg3: memref<8x8x1xf32, #tpu.memory_space<vmem>>, %arg4: memref<8x8x32xbf16, #tpu.memory_space<vmem>>, %arg5: memref<8x8x1xf32, #tpu.memory_space<vmem>>, %arg6: memref<32x32xbf16, #tpu.memory_space<vmem>>, %arg7: memref<1x32xf32, #tpu.memory_space<vmem>>, %arg8: memref<32x1xf32, #tpu.memory_space<vmem>>, %arg9: memref<1x8xf32, #tpu.memory_space<vmem>>) attributes {dimension_semantics = [#tpu.dimension_semantics<parallel>], iteration_bounds = array<i64: 1>, scalar_prefetch = 0 : i64, scratch_operands = 0 : i64, tpu.core_type = #tpu.core_type<tc>, window_params = [{transform_indices = @transform_0, window_bounds = array<i64: 8, 32>}, {transform_indices = @transform_1, window_bounds = array<i64: 8, 8, 32>}, {transform_indices = @transform_2, window_bounds = array<i64: 8, 8, 1>}, {transform_indices = @transform_3, window_bounds = array<i64: 8, 8, 32>}, {transform_indices = @transform_4, window_bounds = array<i64: 8, 8, 1>}, {pipeline_mode = #tpu.pipeline_mode<synchronous>, transform_indices = @transform_5, window_bounds = array<i64: 32, 32>}, {pipeline_mode = #tpu.pipeline_mode<synchronous>, transform_indices = @transform_6, window_bounds = array<i64: 1, 32>}, {pipeline_mode = #tpu.pipeline_mode<synchronous>, transform_indices = @transform_7, window_bounds = array<i64: 32, 1>}, {transform_indices = @transform_8, window_bounds = array<i64: 1, 8>}]} {
    %c0 = arith.constant 0 : index
    %c0_0 = arith.constant 0 : index
    %0 = vector.load %arg6[%c0, %c0_0] : memref<32x32xbf16, #tpu.memory_space<vmem>>, vector<32x32xbf16>
    %c0_1 = arith.constant 0 : index
    %c0_2 = arith.constant 0 : index
    %1 = vector.load %arg7[%c0_1, %c0_2] : memref<1x32xf32, #tpu.memory_space<vmem>>, vector<1x32xf32>
    %c0_3 = arith.constant 0 : index
    %c0_4 = arith.constant 0 : index
    %2 = vector.load %arg8[%c0_3, %c0_4] : memref<32x1xf32, #tpu.memory_space<vmem>>, vector<32x1xf32>
    %c0_5 = arith.constant 0 : index
    %c0_6 = arith.constant 0 : index
    %c0_7 = arith.constant 0 : index
    %3 = vector.load %arg2[%c0_5, %c0_6, %c0_7] : memref<8x8x32xbf16, #tpu.memory_space<vmem>>, vector<8x8x32xbf16>
    %4 = vector.shape_cast %3 : vector<8x8x32xbf16> to vector<64x32xbf16>
    %cst = arith.constant dense<0.000000e+00> : vector<64x32xf32>
    %5 = tpu.matmul %4, %0, %cst {dimension_numbers = #tpu.dot_dimension_numbers<[1], [0], [0], [1], [0, 0, 1, 1], [], []>} : vector<64x32xbf16>, vector<32x32xbf16>, vector<64x32xf32> -> vector<64x32xf32>
    %6 = vector.broadcast %1 : vector<1x32xf32> to vector<64x32xf32>
    %7 = arith.addf %5, %6 : vector<64x32xf32>
    %cst_8 = arith.constant 0.000000e+00 : f32
    %8 = vector.broadcast %cst_8 : f32 to vector<64x32xf32>
    %9 = arith.maximumf %7, %8 : vector<64x32xf32>
    %cst_9 = arith.constant dense<0.000000e+00> : vector<64x1xf32>
    %10 = tpu.matmul %9, %2, %cst_9 {dimension_numbers = #tpu.dot_dimension_numbers<[1], [0], [0], [1], [0, 0, 1, 1], [], []>} : vector<64x32xf32>, vector<32x1xf32>, vector<64x1xf32> -> vector<64x1xf32>
    %11 = vector.shape_cast %10 : vector<64x1xf32> to vector<8x8x1xf32>
    %c0_10 = arith.constant 0 : index
    %c0_11 = arith.constant 0 : index
    %c0_12 = arith.constant 0 : index
    %12 = vector.load %arg3[%c0_10, %c0_11, %c0_12] : memref<8x8x1xf32, #tpu.memory_space<vmem>>, vector<8x8x1xf32>
    %13 = arith.addf %11, %12 : vector<8x8x1xf32>
    %cst_13 = arith.constant dense<0xFF800000> : vector<8x1xf32>
    %14 = vector.multi_reduction <maximumf>, %13, %cst_13 [1] : vector<8x8x1xf32> to vector<8x1xf32>
    %15 = vector.shape_cast %14 : vector<8x1xf32> to vector<8x1x1xf32>
    %16 = vector.broadcast %15 : vector<8x1x1xf32> to vector<8x8x1xf32>
    %17 = arith.subf %13, %16 : vector<8x8x1xf32>
    %18 = math.exp %17 : vector<8x8x1xf32>
    %cst_14 = arith.constant dense<0.000000e+00> : vector<8x1xf32>
    %19 = vector.multi_reduction <add>, %18, %cst_14 [1] : vector<8x8x1xf32> to vector<8x1xf32>
    %20 = vector.shape_cast %19 : vector<8x1xf32> to vector<8x1x1xf32>
    %21 = vector.broadcast %20 : vector<8x1x1xf32> to vector<8x8x1xf32>
    %22 = arith.divf %18, %21 : vector<8x8x1xf32>
    %23 = arith.extf %3 : vector<8x8x32xbf16> to vector<8x8x32xf32>
    %24 = vector.broadcast %22 : vector<8x8x1xf32> to vector<8x8x32xf32>
    %25 = arith.mulf %23, %24 : vector<8x8x32xf32>
    %cst_15 = arith.constant dense<0.000000e+00> : vector<8x32xf32>
    %26 = vector.multi_reduction <add>, %25, %cst_15 [1] : vector<8x8x32xf32> to vector<8x32xf32>
    %c0_16 = arith.constant 0 : index
    %c0_17 = arith.constant 0 : index
    %c0_18 = arith.constant 0 : index
    %27 = vector.load %arg4[%c0_16, %c0_17, %c0_18] : memref<8x8x32xbf16, #tpu.memory_space<vmem>>, vector<8x8x32xbf16>
    %28 = vector.shape_cast %27 : vector<8x8x32xbf16> to vector<64x32xbf16>
    %cst_19 = arith.constant dense<0.000000e+00> : vector<64x32xf32>
    %29 = tpu.matmul %28, %0, %cst_19 {dimension_numbers = #tpu.dot_dimension_numbers<[1], [0], [0], [1], [0, 0, 1, 1], [], []>} : vector<64x32xbf16>, vector<32x32xbf16>, vector<64x32xf32> -> vector<64x32xf32>
    %30 = vector.broadcast %1 : vector<1x32xf32> to vector<64x32xf32>
    %31 = arith.addf %29, %30 : vector<64x32xf32>
    %cst_20 = arith.constant 0.000000e+00 : f32
    %32 = vector.broadcast %cst_20 : f32 to vector<64x32xf32>
    %33 = arith.maximumf %31, %32 : vector<64x32xf32>
    %cst_21 = arith.constant dense<0.000000e+00> : vector<64x1xf32>
    %34 = tpu.matmul %33, %2, %cst_21 {dimension_numbers = #tpu.dot_dimension_numbers<[1], [0], [0], [1], [0, 0, 1, 1], [], []>} : vector<64x32xf32>, vector<32x1xf32>, vector<64x1xf32> -> vector<64x1xf32>
    %35 = vector.shape_cast %34 : vector<64x1xf32> to vector<8x8x1xf32>
    %c0_22 = arith.constant 0 : index
    %c0_23 = arith.constant 0 : index
    %c0_24 = arith.constant 0 : index
    %36 = vector.load %arg5[%c0_22, %c0_23, %c0_24] : memref<8x8x1xf32, #tpu.memory_space<vmem>>, vector<8x8x1xf32>
    %37 = arith.addf %35, %36 : vector<8x8x1xf32>
    %cst_25 = arith.constant dense<0xFF800000> : vector<8x1xf32>
    %38 = vector.multi_reduction <maximumf>, %37, %cst_25 [1] : vector<8x8x1xf32> to vector<8x1xf32>
    %39 = vector.shape_cast %38 : vector<8x1xf32> to vector<8x1x1xf32>
    %40 = vector.broadcast %39 : vector<8x1x1xf32> to vector<8x8x1xf32>
    %41 = arith.subf %37, %40 : vector<8x8x1xf32>
    %42 = math.exp %41 : vector<8x8x1xf32>
    %cst_26 = arith.constant dense<0.000000e+00> : vector<8x1xf32>
    %43 = vector.multi_reduction <add>, %42, %cst_26 [1] : vector<8x8x1xf32> to vector<8x1xf32>
    %44 = vector.shape_cast %43 : vector<8x1xf32> to vector<8x1x1xf32>
    %45 = vector.broadcast %44 : vector<8x1x1xf32> to vector<8x8x1xf32>
    %46 = arith.divf %42, %45 : vector<8x8x1xf32>
    %47 = arith.extf %27 : vector<8x8x32xbf16> to vector<8x8x32xf32>
    %48 = vector.broadcast %46 : vector<8x8x1xf32> to vector<8x8x32xf32>
    %49 = arith.mulf %47, %48 : vector<8x8x32xf32>
    %cst_27 = arith.constant dense<0.000000e+00> : vector<8x32xf32>
    %50 = vector.multi_reduction <add>, %49, %cst_27 [1] : vector<8x8x32xf32> to vector<8x32xf32>
    %c0_28 = arith.constant 0 : index
    %c0_29 = arith.constant 0 : index
    %51 = vector.load %arg1[%c0_28, %c0_29] : memref<8x32xbf16, #tpu.memory_space<vmem>>, vector<8x32xbf16>
    %52 = arith.extf %51 : vector<8x32xbf16> to vector<8x32xf32>
    %53 = arith.mulf %52, %26 : vector<8x32xf32>
    %cst_30 = arith.constant dense<0.000000e+00> : vector<8xf32>
    %54 = vector.multi_reduction <add>, %53, %cst_30 [1] : vector<8x32xf32> to vector<8xf32>
    %55 = arith.mulf %52, %50 : vector<8x32xf32>
    %cst_31 = arith.constant dense<0.000000e+00> : vector<8xf32>
    %56 = vector.multi_reduction <add>, %55, %cst_31 [1] : vector<8x32xf32> to vector<8xf32>
    %57 = arith.subf %56, %54 : vector<8xf32>
    %cst_32 = arith.constant 0.000000e+00 : f32
    %58 = vector.broadcast %cst_32 : f32 to vector<8xf32>
    %59 = arith.maximumf %57, %58 : vector<8xf32>
    %60 = math.absf %57 : vector<8xf32>
    %cst_33 = arith.constant 0.000000e+00 : f32
    %61 = vector.broadcast %cst_33 : f32 to vector<8xf32>
    %62 = arith.subf %61, %60 : vector<8xf32>
    %63 = math.exp %62 : vector<8xf32>
    %64 = math.log1p %63 : vector<8xf32>
    %65 = arith.addf %59, %64 : vector<8xf32>
    %66 = vector.shape_cast %65 : vector<8xf32> to vector<1x8xf32>
    %c0_34 = arith.constant 0 : index
    %c0_35 = arith.constant 0 : index
    %67 = vector.load %arg9[%c0_34, %c0_35] : memref<1x8xf32, #tpu.memory_space<vmem>>, vector<1x8xf32>
    tpu.vector_store %arg9[%c0_34, %c0_35], %66 {strides = array<i32>} : memref<1x8xf32, #tpu.memory_space<vmem>>, vector<1x8xf32>,
    return
  }
  func.func @transform_0(%arg0: i32) -> (i32, i32) {
    %c0_i32 = arith.constant 0 : i32
    %c0_i32_0 = arith.constant 0 : i32
    return %arg0, %c0_i32 : i32, i32
  }
  func.func @transform_1(%arg0: i32) -> (i32, i32, i32) {
    %c0_i32 = arith.constant 0 : i32
    %c0_i32_0 = arith.constant 0 : i32
    %c0_i32_1 = arith.constant 0 : i32
    return %arg0, %c0_i32, %c0_i32_0 : i32, i32, i32
  }
  func.func @transform_2(%arg0: i32) -> (i32, i32, i32) {
    %c0_i32 = arith.constant 0 : i32
    %c0_i32_0 = arith.constant 0 : i32
    %c0_i32_1 = arith.constant 0 : i32
    return %arg0, %c0_i32, %c0_i32_0 : i32, i32, i32
  }
  func.func @transform_3(%arg0: i32) -> (i32, i32, i32) {
    %c0_i32 = arith.constant 0 : i32
    %c0_i32_0 = arith.constant 0 : i32
    %c0_i32_1 = arith.constant 0 : i32
    return %arg0, %c0_i32, %c0_i32_0 : i32, i32, i32
  }
  func.func @transform_4(%arg0: i32) -> (i32, i32, i32) {
    %c0_i32 = arith.constant 0 : i32
    %c0_i32_0 = arith.constant 0 : i32
    %c0_i32_1 = arith.constant 0 : i32
    return %arg0, %c0_i32, %c0_i32_0 : i32, i32, i32
  }
  func.func @transform_5(%arg0: i32) -> (i32, i32) {
    %c0_i32 = arith.constant 0 : i32
    %c0_i32_0 = arith.constant 0 : i32
    %c0_i32_1 = arith.constant 0 : i32
    return %c0_i32, %c0_i32_0 : i32, i32
  }
  func.func @transform_6(%arg0: i32) -> (i32, i32) {
    %c0_i32 = arith.constant 0 : i32
    %c0_i32_0 = arith.constant 0 : i32
    %c0_i32_1 = arith.constant 0 : i32
    return %c0_i32, %c0_i32_0 : i32, i32
  }
  func.func @transform_7(%arg0: i32) -> (i32, i32) {
    %c0_i32 = arith.constant 0 : i32
    %c0_i32_0 = arith.constant 0 : i32
    %c0_i32_1 = arith.constant 0 : i32
    return %c0_i32, %c0_i32_0 : i32, i32
  }
  func.func @transform_8(%arg0: i32) -> (i32, i32) {
    %c0_i32 = arith.constant 0 : i32
    %c0_i32_0 = arith.constant 0 : i32
    return %c0_i32, %arg0 : i32, i32
  }
}

</mosaic_0001>

<llo_original>
// kernel: tpu_custom_call.1
$region0: #{tpu_custom_call.1}
  #allocation0 [shape = 'u32[]', space=smem, size = 0x4, offset = 0x4, fixed_abs, tag = 'smem constant byte address 0x4 - core index']
  #allocation1 [shape = 'u32[72,128]{1,0:T(1,128)}', space=vmem, size = 0x9000, scoped, tag = 'internal scratch']
  %s0 = inlined_call_operand.vmem [shape: bf16[8,32], index: 0, kind: input, shape index: {}]
  %s1 = inlined_call_operand.vmem [shape: bf16[8,8,32], index: 1, kind: input, shape index: {}]
  %s2 = inlined_call_operand.vmem [shape: f32[8,8,1], index: 2, kind: input, shape index: {}]
  %s3 = inlined_call_operand.vmem [shape: bf16[8,8,32], index: 3, kind: input, shape index: {}]
  %s4 = inlined_call_operand.vmem [shape: f32[8,8,1], index: 4, kind: input, shape index: {}]
  %s5 = inlined_call_operand.vmem [shape: bf16[32,32], index: 5, kind: input, shape index: {}]
  %s6 = inlined_call_operand.vmem [shape: f32[1,32], index: 6, kind: input, shape index: {}]
  %s7 = inlined_call_operand.vmem [shape: f32[32,1], index: 7, kind: input, shape index: {}]
  %s8 = inlined_call_operand.hbm [shape: f32[1,8], index: 8, kind: output, shape index: {}]
  %s9 = sld [smem:[#allocation0]]
  $region42: #{tpu_custom_call.1} parent=0
    _
  %s11 = ssub.s32 1, %s9
  %s12 = scalar_select 0, %s11, %s9
  $region1: #{tpu_custom_call.1} parent=0
    #allocation2 [shape = 'u8[512]{0}', space=vmem, size = 0x400, scoped, tag = 'output window, operand 0, single buffered']
    #allocation3 [shape = 's32[1]{0}', space=sflag, size = 0x4, scoped, tag = 'scoped memory for tpu_custom_call.1']
    %13 = vsyncpa [#allocation3], 0
    // Predicated region
    $region2: #{tpu_custom_call.1} parent=1 // pred_check
      _
    $region3: #{tpu_custom_call.1} parent=1 // pred_check_branch
      %15 = sbr.rel (0) target = $region5
    $region4: #{tpu_custom_call.1} parent=1 // pred_region
      _
    $region5: #{tpu_custom_call.1} parent=1 // pred_fallthru
      _
    // Predicated region
    $region6: #{tpu_custom_call.1} parent=1 // pred_check
      _
    $region7: #{tpu_custom_call.1} parent=1 // pred_check_branch
      %17 = sbr.rel (0) target = $region9
    $region8: #{tpu_custom_call.1} parent=1 // pred_region
      _
    $region9: #{tpu_custom_call.1} parent=1 // pred_fallthru
      _
    // Predicated region
    $region10: #{tpu_custom_call.1} parent=1 // pred_check
      _
    $region11: #{tpu_custom_call.1} parent=1 // pred_check_branch
      %19 = sbr.rel (0) target = $region13
    $region12: #{tpu_custom_call.1} parent=1 // pred_region
      _
    $region13: #{tpu_custom_call.1} parent=1 // pred_fallthru
      _
    // Predicated region
    $region14: #{tpu_custom_call.1} parent=1 // pred_check
      _
    $region15: #{tpu_custom_call.1} parent=1 // pred_check_branch
      %21 = sbr.rel (0) target = $region17
    $region16: #{tpu_custom_call.1} parent=1 // pred_region
      _
    $region17: #{tpu_custom_call.1} parent=1 // pred_fallthru
      _
    // Predicated region
    $region18: #{tpu_custom_call.1} parent=1 // pred_check
      _
    $region19: #{tpu_custom_call.1} parent=1 // pred_check_branch
      %23 = sbr.rel (0) target = $region21
    $region20: #{tpu_custom_call.1} parent=1 // pred_region
      _
    $region21: #{tpu_custom_call.1} parent=1 // pred_fallthru
      _
    // Predicated region
    $region22: #{tpu_custom_call.1} parent=1 // pred_check
      _
    $region23: #{tpu_custom_call.1} parent=1 // pred_check_branch
      %25 = sbr.rel (0) target = $region25
    $region24: #{tpu_custom_call.1} parent=1 // pred_region
      _
    $region25: #{tpu_custom_call.1} parent=1 // pred_fallthru
      _
    // Predicated region
    $region26: #{tpu_custom_call.1} parent=1 // pred_check
      _
    $region27: #{tpu_custom_call.1} parent=1 // pred_check_branch
      %27 = sbr.rel (0) target = $region29
    $region28: #{tpu_custom_call.1} parent=1 // pred_region
      _
    $region29: #{tpu_custom_call.1} parent=1 // pred_fallthru
      _
    // Predicated region
    $region30: #{tpu_custom_call.1} parent=1 // pred_check
      _
    $region31: #{tpu_custom_call.1} parent=1 // pred_check_branch
      %29 = sbr.rel (0) target = $region33
    $region32: #{tpu_custom_call.1} parent=1 // pred_region
      _
    $region33: #{tpu_custom_call.1} parent=1 // pred_fallthru
      _
    %v31 = vld [vmem:[%s5] sm:$0xf]
    %v32 = vld [vmem:[%s5 + $0x4] sm:$0xf]
    %v33 = vld [vmem:[%s5 + $0x8] sm:$0xf]
    %v34 = vld [vmem:[%s5 + $0xc] sm:$0xf]
    %v35 = vld [vmem:[%s6] sm:$0x1]
    %v36 = vld [vmem:[%s7] sm:$0xff]
    %v37 = vld [vmem:[%s7 + $0x8] sm:$0xff]
    %v38 = vld [vmem:[%s7 + $0x10] sm:$0xff]
    %v39 = vld [vmem:[%s7 + $0x18] sm:$0xff]
    %v40 = vld [vmem:[%s1] sm:$0xf]
    %v41 = vld [vmem:[%s1 + $0x4] sm:$0xf]
    %v42 = vld [vmem:[%s1 + $0x8] sm:$0xf]
    %v43 = vld [vmem:[%s1 + $0xc] sm:$0xf]
    %v44 = vld [vmem:[%s1 + $0x10] sm:$0xf]
    %v45 = vld [vmem:[%s1 + $0x14] sm:$0xf]
    %v46 = vld [vmem:[%s1 + $0x18] sm:$0xf]
    %v47 = vld [vmem:[%s1 + $0x1c] sm:$0xf]
    %v49 = vperm.slane %v35, 0
    %v59 = vunpack.c.l.b16 %v40
    %v60 = vunpack.c.l.b16 %v41
    %v61 = vunpack.c.l.b16 %v42
    %v62 = vunpack.c.l.b16 %v43
    %v63 = vunpack.c.l.b16 %v44
    %v64 = vunpack.c.l.b16 %v45
    %v65 = vunpack.c.l.b16 %v46
    %v66 = vunpack.c.l.b16 %v47
    %v67 = vpack.c.b16 %v60, %v59
    %v68 = vpack.c.b16 %v62, %v61
    %v69 = vpack.c.b16 %v64, %v63
    %v70 = vpack.c.b16 %v66, %v65
    %v75 = vunpack.c.l.b16 %v31
    %v76 = vunpack.c.l.b16 %v32
    %v77 = vunpack.c.l.b16 %v33
    %v78 = vunpack.c.l.b16 %v34
    %v79 = vpack.c.b16 %v76, %v75
    %v80 = vpack.c.b16 %v78, %v77
    %vm83 = vcmask 261120
    %v85 = vsel %vm83, %v67, 0
    %v88 = vsel %vm83, %v68, 0
    %v91 = vsel %vm83, %v69, 0
    %v94 = vsel %vm83, %v70, 0
    %96 = vmatpush.bf16.msra.mxu0 0
    %97 = vmatpush.bf16.msra.mxu0 0
    %98 = vmatpush.bf16.msra.mxu0 0
    %99 = vmatpush.bf16.msra.mxu0 0
    %100 = vmatpush.bf16.msra.mxu0 0
    %101 = vmatpush.bf16.msra.mxu0 0
    %102 = vmatpush.bf16.msra.mxu0 %v80
    %103 = vmatpush.bf16.msra.mxu0 %v79
    %104 = vmatmul.bf16.gmra.mxu0 %v85
    %v105 = vpop.f32.mrf.mxu0
    %v106 = vadd.f32 %v49, %v105
    %v107 = vpop.f32.mrf.mxu0
    %v108 = vadd.f32 %v49, %v107
    %109 = vmatmul.bf16.gmra.mxu0 %v88
    %v110 = vpop.f32.mrf.mxu0
    %v111 = vadd.f32 %v49, %v110
    %v112 = vpop.f32.mrf.mxu0
    %v113 = vadd.f32 %v49, %v112
    %114 = vmatmul.bf16.gmra.mxu0 %v91
    %v115 = vpop.f32.mrf.mxu0
    %v116 = vadd.f32 %v49, %v115
    %v117 = vpop.f32.mrf.mxu0
    %v118 = vadd.f32 %v49, %v117
    %119 = vmatmul.bf16.gmra.mxu0 %v94
    %v120 = vpop.f32.mrf.mxu0
    %v121 = vadd.f32 %v49, %v120
    %v122 = vpop.f32.mrf.mxu0
    %v123 = vadd.f32 %v49, %v122
    %124 = vdwg.mxu0
    %v125 = vmax.f32 %v106, 0.0
    %v126 = vmax.f32 %v108, 0.0
    %v127 = vmax.f32 %v111, 0.0
    %v128 = vmax.f32 %v113, 0.0
    %v129 = vmax.f32 %v116, 0.0
    %v130 = vmax.f32 %v118, 0.0
    %v131 = vmax.f32 %v121, 0.0
    %v132 = vmax.f32 %v123, 0.0
    %v134 = vsel %vm83, %v125, 0
    %v137 = vsel %vm83, %v126, 0
    %v140 = vsel %vm83, %v127, 0
    %v143 = vsel %vm83, %v128, 0
    %v146 = vsel %vm83, %v129, 0
    %v149 = vsel %vm83, %v130, 0
    %v152 = vsel %vm83, %v131, 0
    %v155 = vsel %vm83, %v132, 0
    %157 = vmatpush.msra.mxu0 0.0
    %158 = vmatpush.msra.mxu0 0.0
    %159 = vmatpush.msra.mxu0 0.0
    %160 = vmatpush.msra.mxu0 0.0
    %161 = vmatpush.msra.mxu0 0.0
    %162 = vmatpush.msra.mxu0 0.0
    %163 = vmatpush.msra.mxu0 0.0
    %164 = vmatpush.msra.mxu0 0.0
    %165 = vmatpush.msra.mxu0 0.0
    %166 = vmatpush.msra.mxu0 0.0
    %167 = vmatpush.msra.mxu0 0.0
    %168 = vmatpush.msra.mxu0 0.0
    %169 = vmatpush.msra.mxu0 %v39
    %170 = vmatpush.msra.mxu0 %v38
    %171 = vmatpush.msra.mxu0 %v37
    %172 = vmatpush.msra.mxu0 %v36
    %173 = vmatmul.f32.gmra.mxu0 %v134
    %v174 = vpop.f32.mrf.mxu0
    %v175 = vadd.f32 0.0, %v174
    %176 = vmatmul.f32.gmra.mxu0 %v137
    %v177 = vpop.f32.mrf.mxu0
    %v178 = vadd.f32 0.0, %v177
    %179 = vmatmul.f32.gmra.mxu0 %v140
    %v180 = vpop.f32.mrf.mxu0
    %v181 = vadd.f32 0.0, %v180
    %182 = vmatmul.f32.gmra.mxu0 %v143
    %v183 = vpop.f32.mrf.mxu0
    %v184 = vadd.f32 0.0, %v183
    %185 = vmatmul.f32.gmra.mxu0 %v146
    %v186 = vpop.f32.mrf.mxu0
    %v187 = vadd.f32 0.0, %v186
    %188 = vmatmul.f32.gmra.mxu0 %v149
    %v189 = vpop.f32.mrf.mxu0
    %v190 = vadd.f32 0.0, %v189
    %191 = vmatmul.f32.gmra.mxu0 %v152
    %v192 = vpop.f32.mrf.mxu0
    %v193 = vadd.f32 0.0, %v192
    %194 = vmatmul.f32.gmra.mxu0 %v155
    %v195 = vpop.f32.mrf.mxu0
    %v196 = vadd.f32 0.0, %v195
    %197 = vdwg.mxu0
    %v198 = vld [vmem:[%s2] sm:$0xff]
    %v199 = vld [vmem:[%s2 + $0x8] sm:$0xff]
    %v200 = vld [vmem:[%s2 + $0x10] sm:$0xff]
    %v201 = vld [vmem:[%s2 + $0x18] sm:$0xff]
    %v202 = vld [vmem:[%s2 + $0x20] sm:$0xff]
    %v203 = vld [vmem:[%s2 + $0x28] sm:$0xff]
    %v204 = vld [vmem:[%s2 + $0x30] sm:$0xff]
    %v205 = vld [vmem:[%s2 + $0x38] sm:$0xff]
    %v206 = vadd.f32 %v175, %v198
    %v207 = vadd.f32 %v178, %v199
    %v208 = vadd.f32 %v181, %v200
    %v209 = vadd.f32 %v184, %v201
    %v210 = vadd.f32 %v187, %v202
    %v211 = vadd.f32 %v190, %v203
    %v212 = vadd.f32 %v193, %v204
    %v213 = vadd.f32 %v196, %v205
    %vm214 = vcmask 7168
    %v215 = vsel %vm214, %v206, -inf
    %v216 = vrot.slane %v215, 4
    %v217 = vmax.f32 %v215, %v216
    %v218 = vrot.slane %v217, 2
    %v219 = vmax.f32 %v217, %v218
    %v220 = vrot.slane %v219, 1
    %v221 = vmax.f32 %v219, %v220
    %v222 = vsel %vm214, %v207, -inf
    %v223 = vrot.slane %v222, 4
    %v224 = vmax.f32 %v222, %v223
    %v225 = vrot.slane %v224, 2
    %v226 = vmax.f32 %v224, %v225
    %v227 = vrot.slane %v226, 1
    %v228 = vmax.f32 %v226, %v227
    %v229 = vsel %vm214, %v208, -inf
    %v230 = vrot.slane %v229, 4
    %v231 = vmax.f32 %v229, %v230
    %v232 = vrot.slane %v231, 2
    %v233 = vmax.f32 %v231, %v232
    %v234 = vrot.slane %v233, 1
    %v235 = vmax.f32 %v233, %v234
    %v236 = vsel %vm214, %v209, -inf
    %v237 = vrot.slane %v236, 4
    %v238 = vmax.f32 %v236, %v237
    %v239 = vrot.slane %v238, 2
    %v240 = vmax.f32 %v238, %v239
    %v241 = vrot.slane %v240, 1
    %v242 = vmax.f32 %v240, %v241
    %v243 = vsel %vm214, %v210, -inf
    %v244 = vrot.slane %v243, 4
    %v245 = vmax.f32 %v243, %v244
    %v246 = vrot.slane %v245, 2
    %v247 = vmax.f32 %v245, %v246
    %v248 = vrot.slane %v247, 1
    %v249 = vmax.f32 %v247, %v248
    %v250 = vsel %vm214, %v211, -inf
    %v251 = vrot.slane %v250, 4
    %v252 = vmax.f32 %v250, %v251
    %v253 = vrot.slane %v252, 2
    %v254 = vmax.f32 %v252, %v253
    %v255 = vrot.slane %v254, 1
    %v256 = vmax.f32 %v254, %v255
    %v257 = vsel %vm214, %v212, -inf
    %v258 = vrot.slane %v257, 4
    %v259 = vmax.f32 %v257, %v258
    %v260 = vrot.slane %v259, 2
    %v261 = vmax.f32 %v259, %v260
    %v262 = vrot.slane %v261, 1
    %v263 = vmax.f32 %v261, %v262
    %v264 = vsel %vm214, %v213, -inf
    %v265 = vrot.slane %v264, 4
    %v266 = vmax.f32 %v264, %v265
    %v267 = vrot.slane %v266, 2
    %v268 = vmax.f32 %v266, %v267
    %v269 = vrot.slane %v268, 1
    %v270 = vmax.f32 %v268, %v269
    %v271 = vsub.f32 %v206, %v221
    %v272 = vsub.f32 %v207, %v228
    %v273 = vsub.f32 %v208, %v235
    %v274 = vsub.f32 %v209, %v242
    %v275 = vsub.f32 %v210, %v249
    %v276 = vsub.f32 %v211, %v256
    %v277 = vsub.f32 %v212, %v263
    %v278 = vsub.f32 %v213, %v270
    %v279 = vmul.f32 %v271, 1.442695
    %v280 = vpow.pop %v279
    %v281 = vmul.f32 %v272, 1.442695
    %v282 = vpow.pop %v281
    %v283 = vmul.f32 %v273, 1.442695
    %v284 = vpow.pop %v283
    %v285 = vmul.f32 %v274, 1.442695
    %v286 = vpow.pop %v285
    %v287 = vmul.f32 %v275, 1.442695
    %v288 = vpow.pop %v287
    %v289 = vmul.f32 %v276, 1.442695
    %v290 = vpow.pop %v289
    %v291 = vmul.f32 %v277, 1.442695
    %v292 = vpow.pop %v291
    %v293 = vmul.f32 %v278, 1.442695
    %v294 = vpow.pop %v293
    %v295 = vsel %vm214, %v280, 0.0
    %v296 = vrot.slane %v295, 4
    %v297 = vadd.f32 %v295, %v296
    %v298 = vrot.slane %v297, 2
    %v299 = vadd.f32 %v297, %v298
    %v300 = vrot.slane %v299, 1
    %v301 = vadd.f32 %v299, %v300
    %v302 = vsel %vm214, %v282, 0.0
    %v303 = vrot.slane %v302, 4
    %v304 = vadd.f32 %v302, %v303
    %v305 = vrot.slane %v304, 2
    %v306 = vadd.f32 %v304, %v305
    %v307 = vrot.slane %v306, 1
    %v308 = vadd.f32 %v306, %v307
    %v309 = vsel %vm214, %v284, 0.0
    %v310 = vrot.slane %v309, 4
    %v311 = vadd.f32 %v309, %v310
    %v312 = vrot.slane %v311, 2
    %v313 = vadd.f32 %v311, %v312
    %v314 = vrot.slane %v313, 1
    %v315 = vadd.f32 %v313, %v314
    %v316 = vsel %vm214, %v286, 0.0
    %v317 = vrot.slane %v316, 4
    %v318 = vadd.f32 %v316, %v317
    %v319 = vrot.slane %v318, 2
    %v320 = vadd.f32 %v318, %v319
    %v321 = vrot.slane %v320, 1
    %v322 = vadd.f32 %v320, %v321
    %v323 = vsel %vm214, %v288, 0.0
    %v324 = vrot.slane %v323, 4
    %v325 = vadd.f32 %v323, %v324
    %v326 = vrot.slane %v325, 2
    %v327 = vadd.f32 %v325, %v326
    %v328 = vrot.slane %v327, 1
    %v329 = vadd.f32 %v327, %v328
    %v330 = vsel %vm214, %v290, 0.0
    %v331 = vrot.slane %v330, 4
    %v332 = vadd.f32 %v330, %v331
    %v333 = vrot.slane %v332, 2
    %v334 = vadd.f32 %v332, %v333
    %v335 = vrot.slane %v334, 1
    %v336 = vadd.f32 %v334, %v335
    %v337 = vsel %vm214, %v292, 0.0
    %v338 = vrot.slane %v337, 4
    %v339 = vadd.f32 %v337, %v338
    %v340 = vrot.slane %v339, 2
    %v341 = vadd.f32 %v339, %v340
    %v342 = vrot.slane %v341, 1
    %v343 = vadd.f32 %v341, %v342
    %v344 = vsel %vm214, %v294, 0.0
    %v345 = vrot.slane %v344, 4
    %v346 = vadd.f32 %v344, %v345
    %v347 = vrot.slane %v346, 2
    %v348 = vadd.f32 %v346, %v347
    %v349 = vrot.slane %v348, 1
    %v350 = vadd.f32 %v348, %v349
    %v351 = vrcp.pop %v301
    %v352 = vmul.f32 %v301, %v351
    %v353 = vsub.f32 1.0, %v352
    %v354 = vmul.f32 %v351, %v353
    %v355 = vadd.f32 %v351, %v354
    %vm356 = vweird.f32 %v301
    %vm357 = vweird.f32 %v351
    %vm358 = vmor %vm356, %vm357
    %v359 = vsel %vm358, %v351, %v355
    %v360 = vand.u32 2147483647, %v301
    %vm361 = vcmp.eq.f32.partialorder %v360, 8.507059e+37
    %v362 = vand.u32 %v301, 2147483648
    %v363 = vor.u32 1.1754944e-38, %v362
    %v364 = vsel %vm361, %v363, %v359
    %v365 = vmul.f32 %v280, %v364
    %v366 = vrcp.pop %v308
    %v367 = vmul.f32 %v308, %v366
    %v368 = vsub.f32 1.0, %v367
    %v369 = vmul.f32 %v366, %v368
    %v370 = vadd.f32 %v366, %v369
    %vm371 = vweird.f32 %v308
    %vm372 = vweird.f32 %v366
    %vm373 = vmor %vm371, %vm372
    %v374 = vsel %vm373, %v366, %v370
    %v375 = vand.u32 2147483647, %v308
    %vm376 = vcmp.eq.f32.partialorder %v375, 8.507059e+37
    %v377 = vand.u32 %v308, 2147483648
    %v378 = vor.u32 1.1754944e-38, %v377
    %v379 = vsel %vm376, %v378, %v374
    %v380 = vmul.f32 %v282, %v379
    %v381 = vrcp.pop %v315
    %v382 = vmul.f32 %v315, %v381
    %v383 = vsub.f32 1.0, %v382
    %v384 = vmul.f32 %v381, %v383
    %v385 = vadd.f32 %v381, %v384
    %vm386 = vweird.f32 %v315
    %vm387 = vweird.f32 %v381
    %vm388 = vmor %vm386, %vm387
    %v389 = vsel %vm388, %v381, %v385
    %v390 = vand.u32 2147483647, %v315
    %vm391 = vcmp.eq.f32.partialorder %v390, 8.507059e+37
    %v392 = vand.u32 %v315, 2147483648
    %v393 = vor.u32 1.1754944e-38, %v392
    %v394 = vsel %vm391, %v393, %v389
    %v395 = vmul.f32 %v284, %v394
    %v396 = vrcp.pop %v322
    %v397 = vmul.f32 %v322, %v396
    %v398 = vsub.f32 1.0, %v397
    %v399 = vmul.f32 %v396, %v398
    %v400 = vadd.f32 %v396, %v399
    %vm401 = vweird.f32 %v322
    %vm402 = vweird.f32 %v396
    %vm403 = vmor %vm401, %vm402
    %v404 = vsel %vm403, %v396, %v400
    %v405 = vand.u32 2147483647, %v322
    %vm406 = vcmp.eq.f32.partialorder %v405, 8.507059e+37
    %v407 = vand.u32 %v322, 2147483648
    %v408 = vor.u32 1.1754944e-38, %v407
    %v409 = vsel %vm406, %v408, %v404
    %v410 = vmul.f32 %v286, %v409
    %v411 = vrcp.pop %v329
    %v412 = vmul.f32 %v329, %v411
    %v413 = vsub.f32 1.0, %v412
    %v414 = vmul.f32 %v411, %v413
    %v415 = vadd.f32 %v411, %v414
    %vm416 = vweird.f32 %v329
    %vm417 = vweird.f32 %v411
    %vm418 = vmor %vm416, %vm417
    %v419 = vsel %vm418, %v411, %v415
    %v420 = vand.u32 2147483647, %v329
    %vm421 = vcmp.eq.f32.partialorder %v420, 8.507059e+37
    %v422 = vand.u32 %v329, 2147483648
    %v423 = vor.u32 1.1754944e-38, %v422
    %v424 = vsel %vm421, %v423, %v419
    %v425 = vmul.f32 %v288, %v424
    %v426 = vrcp.pop %v336
    %v427 = vmul.f32 %v336, %v426
    %v428 = vsub.f32 1.0, %v427
    %v429 = vmul.f32 %v426, %v428
    %v430 = vadd.f32 %v426, %v429
    %vm431 = vweird.f32 %v336
    %vm432 = vweird.f32 %v426
    %vm433 = vmor %vm431, %vm432
    %v434 = vsel %vm433, %v426, %v430
    %v435 = vand.u32 2147483647, %v336
    %vm436 = vcmp.eq.f32.partialorder %v435, 8.507059e+37
    %v437 = vand.u32 %v336, 2147483648
    %v438 = vor.u32 1.1754944e-38, %v437
    %v439 = vsel %vm436, %v438, %v434
    %v440 = vmul.f32 %v290, %v439
    %v441 = vrcp.pop %v343
    %v442 = vmul.f32 %v343, %v441
    %v443 = vsub.f32 1.0, %v442
    %v444 = vmul.f32 %v441, %v443
    %v445 = vadd.f32 %v441, %v444
    %vm446 = vweird.f32 %v343
    %vm447 = vweird.f32 %v441
    %vm448 = vmor %vm446, %vm447
    %v449 = vsel %vm448, %v441, %v445
    %v450 = vand.u32 2147483647, %v343
    %vm451 = vcmp.eq.f32.partialorder %v450, 8.507059e+37
    %v452 = vand.u32 %v343, 2147483648
    %v453 = vor.u32 1.1754944e-38, %v452
    %v454 = vsel %vm451, %v453, %v449
    %v455 = vmul.f32 %v292, %v454
    %v456 = vrcp.pop %v350
    %v457 = vmul.f32 %v350, %v456
    %v458 = vsub.f32 1.0, %v457
    %v459 = vmul.f32 %v456, %v458
    %v460 = vadd.f32 %v456, %v459
    %vm461 = vweird.f32 %v350
    %vm462 = vweird.f32 %v456
    %vm463 = vmor %vm461, %vm462
    %v464 = vsel %vm463, %v456, %v460
    %v465 = vand.u32 2147483647, %v350
    %vm466 = vcmp.eq.f32.partialorder %v465, 8.507059e+37
    %v467 = vand.u32 %v350, 2147483648
    %v468 = vor.u32 1.1754944e-38, %v467
    %v469 = vsel %vm466, %v468, %v464
    %v470 = vmul.f32 %v294, %v469
    %v471 = vunpack.c.l.bf16 %v40
    %v472 = vunpack.c.l.bf16 %v41
    %v473 = vunpack.c.l.bf16 %v42
    %v474 = vunpack.c.l.bf16 %v43
    %v475 = vunpack.c.l.bf16 %v44
    %v476 = vunpack.c.l.bf16 %v45
    %v477 = vunpack.c.l.bf16 %v46
    %v478 = vunpack.c.l.bf16 %v47
    %480 = vset.pattern.permute.xlu0 0
    %481 = vperm.xlu0 %480, %v365
    %v482 = vpop.permute.xlu0 %481
    %485 = vset.pattern.permute.xlu0 0
    %486 = vperm.xlu0 %485, %v380
    %v487 = vpop.permute.xlu0 %486
    %490 = vset.pattern.permute.xlu0 0
    %491 = vperm.xlu0 %490, %v395
    %v492 = vpop.permute.xlu0 %491
    %495 = vset.pattern.permute.xlu0 0
    %496 = vperm.xlu0 %495, %v410
    %v497 = vpop.permute.xlu0 %496
    %500 = vset.pattern.permute.xlu0 0
    %501 = vperm.xlu0 %500, %v425
    %v502 = vpop.permute.xlu0 %501
    %505 = vset.pattern.permute.xlu0 0
    %506 = vperm.xlu0 %505, %v440
    %v507 = vpop.permute.xlu0 %506
    %510 = vset.pattern.permute.xlu0 0
    %511 = vperm.xlu0 %510, %v455
    %v512 = vpop.permute.xlu0 %511
    %515 = vset.pattern.permute.xlu0 0
    %516 = vperm.xlu0 %515, %v470
    %v517 = vpop.permute.xlu0 %516
    %v519 = vmul.f32 %v471, %v482
    %v520 = vmul.f32 %v472, %v487
    %v521 = vmul.f32 %v473, %v492
    %v522 = vmul.f32 %v474, %v497
    %v523 = vmul.f32 %v475, %v502
    %v524 = vmul.f32 %v476, %v507
    %v525 = vmul.f32 %v477, %v512
    %v526 = vmul.f32 %v478, %v517
    %v527 = vsel %vm83, %v519, 0.0
    %v528 = vrot.slane %v527, 4
    %v529 = vadd.f32 %v527, %v528
    %v530 = vrot.slane %v529, 2
    %v531 = vadd.f32 %v529, %v530
    %v532 = vrot.slane %v531, 1
    %v533 = vadd.f32 %v531, %v532
    %v534 = vsel %vm83, %v520, 0.0
    %v535 = vrot.slane %v534, 4
    %v536 = vadd.f32 %v534, %v535
    %v537 = vrot.slane %v536, 2
    %v538 = vadd.f32 %v536, %v537
    %v539 = vrot.slane %v538, 1
    %v540 = vadd.f32 %v538, %v539
    %v541 = vsel %vm83, %v521, 0.0
    %v542 = vrot.slane %v541, 4
    %v543 = vadd.f32 %v541, %v542
    %v544 = vrot.slane %v543, 2
    %v545 = vadd.f32 %v543, %v544
    %v546 = vrot.slane %v545, 1
    %v547 = vadd.f32 %v545, %v546
    %v548 = vsel %vm83, %v522, 0.0
    %v549 = vrot.slane %v548, 4
    %v550 = vadd.f32 %v548, %v549
    %v551 = vrot.slane %v550, 2
    %v552 = vadd.f32 %v550, %v551
    %v553 = vrot.slane %v552, 1
    %v554 = vadd.f32 %v552, %v553
    %v555 = vsel %vm83, %v523, 0.0
    %v556 = vrot.slane %v555, 4
    %v557 = vadd.f32 %v555, %v556
    %v558 = vrot.slane %v557, 2
    %v559 = vadd.f32 %v557, %v558
    %v560 = vrot.slane %v559, 1
    %v561 = vadd.f32 %v559, %v560
    %v562 = vsel %vm83, %v524, 0.0
    %v563 = vrot.slane %v562, 4
    %v564 = vadd.f32 %v562, %v563
    %v565 = vrot.slane %v564, 2
    %v566 = vadd.f32 %v564, %v565
    %v567 = vrot.slane %v566, 1
    %v568 = vadd.f32 %v566, %v567
    %v569 = vsel %vm83, %v525, 0.0
    %v570 = vrot.slane %v569, 4
    %v571 = vadd.f32 %v569, %v570
    %v572 = vrot.slane %v571, 2
    %v573 = vadd.f32 %v571, %v572
    %v574 = vrot.slane %v573, 1
    %v575 = vadd.f32 %v573, %v574
    %v576 = vsel %vm83, %v526, 0.0
    %v577 = vrot.slane %v576, 4
    %v578 = vadd.f32 %v576, %v577
    %v579 = vrot.slane %v578, 2
    %v580 = vadd.f32 %v578, %v579
    %v581 = vrot.slane %v580, 1
    %v582 = vadd.f32 %v580, %v581
    %v583 = vld [vmem:[%s3] sm:$0xf]
    %v584 = vld [vmem:[%s3 + $0x4] sm:$0xf]
    %v585 = vld [vmem:[%s3 + $0x8] sm:$0xf]
    %v586 = vld [vmem:[%s3 + $0xc] sm:$0xf]
    %v587 = vld [vmem:[%s3 + $0x10] sm:$0xf]
    %v588 = vld [vmem:[%s3 + $0x14] sm:$0xf]
    %v589 = vld [vmem:[%s3 + $0x18] sm:$0xf]
    %v590 = vld [vmem:[%s3 + $0x1c] sm:$0xf]
    %v599 = vunpack.c.l.b16 %v583
    %v600 = vunpack.c.l.b16 %v584
    %v601 = vunpack.c.l.b16 %v585
    %v602 = vunpack.c.l.b16 %v586
    %v603 = vunpack.c.l.b16 %v587
    %v604 = vunpack.c.l.b16 %v588
    %v605 = vunpack.c.l.b16 %v589
    %v606 = vunpack.c.l.b16 %v590
    %v607 = vpack.c.b16 %v600, %v599
    %v608 = vpack.c.b16 %v602, %v601
    %v609 = vpack.c.b16 %v604, %v603
    %v610 = vpack.c.b16 %v606, %v605
    %v612 = vsel %vm83, %v607, 0
    %v615 = vsel %vm83, %v608, 0
    %v618 = vsel %vm83, %v609, 0
    %v621 = vsel %vm83, %v610, 0
    %623 = vmatpush.bf16.msra.mxu0 0
    %624 = vmatpush.bf16.msra.mxu0 0
    %625 = vmatpush.bf16.msra.mxu0 0
    %626 = vmatpush.bf16.msra.mxu0 0
    %627 = vmatpush.bf16.msra.mxu0 0
    %628 = vmatpush.bf16.msra.mxu0 0
    %629 = vmatpush.bf16.msra.mxu0 %v80
    %630 = vmatpush.bf16.msra.mxu0 %v79
    %631 = vmatmul.bf16.gmra.mxu0 %v612
    %v632 = vpop.f32.mrf.mxu0
    %v633 = vadd.f32 %v49, %v632
    %v634 = vpop.f32.mrf.mxu0
    %v635 = vadd.f32 %v49, %v634
    %636 = vmatmul.bf16.gmra.mxu0 %v615
    %v637 = vpop.f32.mrf.mxu0
    %v638 = vadd.f32 %v49, %v637
    %v639 = vpop.f32.mrf.mxu0
    %v640 = vadd.f32 %v49, %v639
    %641 = vmatmul.bf16.gmra.mxu0 %v618
    %v642 = vpop.f32.mrf.mxu0
    %v643 = vadd.f32 %v49, %v642
    %v644 = vpop.f32.mrf.mxu0
    %v645 = vadd.f32 %v49, %v644
    %646 = vmatmul.bf16.gmra.mxu0 %v621
    %v647 = vpop.f32.mrf.mxu0
    %v648 = vadd.f32 %v49, %v647
    %v649 = vpop.f32.mrf.mxu0
    %v650 = vadd.f32 %v49, %v649
    %651 = vdwg.mxu0
    %v652 = vmax.f32 %v633, 0.0
    %v653 = vmax.f32 %v635, 0.0
    %v654 = vmax.f32 %v638, 0.0
    %v655 = vmax.f32 %v640, 0.0
    %v656 = vmax.f32 %v643, 0.0
    %v657 = vmax.f32 %v645, 0.0
    %v658 = vmax.f32 %v648, 0.0
    %v659 = vmax.f32 %v650, 0.0
    %v661 = vsel %vm83, %v652, 0
    %v664 = vsel %vm83, %v653, 0
    %v667 = vsel %vm83, %v654, 0
    %v670 = vsel %vm83, %v655, 0
    %v673 = vsel %vm83, %v656, 0
    %v676 = vsel %vm83, %v657, 0
    %v679 = vsel %vm83, %v658, 0
    %v682 = vsel %vm83, %v659, 0
    %684 = vmatpush.msra.mxu0 0.0
    %685 = vmatpush.msra.mxu0 0.0
    %686 = vmatpush.msra.mxu0 0.0
    %687 = vmatpush.msra.mxu0 0.0
    %688 = vmatpush.msra.mxu0 0.0
    %689 = vmatpush.msra.mxu0 0.0
    %690 = vmatpush.msra.mxu0 0.0
    %691 = vmatpush.msra.mxu0 0.0
    %692 = vmatpush.msra.mxu0 0.0
    %693 = vmatpush.msra.mxu0 0.0
    %694 = vmatpush.msra.mxu0 0.0
    %695 = vmatpush.msra.mxu0 0.0
    %696 = vmatpush.msra.mxu0 %v39
    %697 = vmatpush.msra.mxu0 %v38
    %698 = vmatpush.msra.mxu0 %v37
    %699 = vmatpush.msra.mxu0 %v36
    %700 = vmatmul.f32.gmra.mxu0 %v661
    %v701 = vpop.f32.mrf.mxu0
    %v702 = vadd.f32 0.0, %v701
    %703 = vmatmul.f32.gmra.mxu0 %v664
    %v704 = vpop.f32.mrf.mxu0
    %v705 = vadd.f32 0.0, %v704
    %706 = vmatmul.f32.gmra.mxu0 %v667
    %v707 = vpop.f32.mrf.mxu0
    %v708 = vadd.f32 0.0, %v707
    %709 = vmatmul.f32.gmra.mxu0 %v670
    %v710 = vpop.f32.mrf.mxu0
    %v711 = vadd.f32 0.0, %v710
    %712 = vmatmul.f32.gmra.mxu0 %v673
    %v713 = vpop.f32.mrf.mxu0
    %v714 = vadd.f32 0.0, %v713
    %715 = vmatmul.f32.gmra.mxu0 %v676
    %v716 = vpop.f32.mrf.mxu0
    %v717 = vadd.f32 0.0, %v716
    %718 = vmatmul.f32.gmra.mxu0 %v679
    %v719 = vpop.f32.mrf.mxu0
    %v720 = vadd.f32 0.0, %v719
    %721 = vmatmul.f32.gmra.mxu0 %v682
    %v722 = vpop.f32.mrf.mxu0
    %v723 = vadd.f32 0.0, %v722
    %724 = vdwg.mxu0
    %v725 = vld [vmem:[%s4] sm:$0xff]
    %v726 = vld [vmem:[%s4 + $0x8] sm:$0xff]
    %v727 = vld [vmem:[%s4 + $0x10] sm:$0xff]
    %v728 = vld [vmem:[%s4 + $0x18] sm:$0xff]
    %v729 = vld [vmem:[%s4 + $0x20] sm:$0xff]
    %v730 = vld [vmem:[%s4 + $0x28] sm:$0xff]
    %v731 = vld [vmem:[%s4 + $0x30] sm:$0xff]
    %v732 = vld [vmem:[%s4 + $0x38] sm:$0xff]
    %v733 = vadd.f32 %v702, %v725
    %v734 = vadd.f32 %v705, %v726
    %v735 = vadd.f32 %v708, %v727
    %v736 = vadd.f32 %v711, %v728
    %v737 = vadd.f32 %v714, %v729
    %v738 = vadd.f32 %v717, %v730
    %v739 = vadd.f32 %v720, %v731
    %v740 = vadd.f32 %v723, %v732
    %v741 = vsel %vm214, %v733, -inf
    %v742 = vrot.slane %v741, 4
    %v743 = vmax.f32 %v741, %v742
    %v744 = vrot.slane %v743, 2
    %v745 = vmax.f32 %v743, %v744
    %v746 = vrot.slane %v745, 1
    %v747 = vmax.f32 %v745, %v746
    %v748 = vsel %vm214, %v734, -inf
    %v749 = vrot.slane %v748, 4
    %v750 = vmax.f32 %v748, %v749
    %v751 = vrot.slane %v750, 2
    %v752 = vmax.f32 %v750, %v751
    %v753 = vrot.slane %v752, 1
    %v754 = vmax.f32 %v752, %v753
    %v755 = vsel %vm214, %v735, -inf
    %v756 = vrot.slane %v755, 4
    %v757 = vmax.f32 %v755, %v756
    %v758 = vrot.slane %v757, 2
    %v759 = vmax.f32 %v757, %v758
    %v760 = vrot.slane %v759, 1
    %v761 = vmax.f32 %v759, %v760
    %v762 = vsel %vm214, %v736, -inf
    %v763 = vrot.slane %v762, 4
    %v764 = vmax.f32 %v762, %v763
    %v765 = vrot.slane %v764, 2
    %v766 = vmax.f32 %v764, %v765
    %v767 = vrot.slane %v766, 1
    %v768 = vmax.f32 %v766, %v767
    %v769 = vsel %vm214, %v737, -inf
    %v770 = vrot.slane %v769, 4
    %v771 = vmax.f32 %v769, %v770
    %v772 = vrot.slane %v771, 2
    %v773 = vmax.f32 %v771, %v772
    %v774 = vrot.slane %v773, 1
    %v775 = vmax.f32 %v773, %v774
    %v776 = vsel %vm214, %v738, -inf
    %v777 = vrot.slane %v776, 4
    %v778 = vmax.f32 %v776, %v777
    %v779 = vrot.slane %v778, 2
    %v780 = vmax.f32 %v778, %v779
    %v781 = vrot.slane %v780, 1
    %v782 = vmax.f32 %v780, %v781
    %v783 = vsel %vm214, %v739, -inf
    %v784 = vrot.slane %v783, 4
    %v785 = vmax.f32 %v783, %v784
    %v786 = vrot.slane %v785, 2
    %v787 = vmax.f32 %v785, %v786
    %v788 = vrot.slane %v787, 1
    %v789 = vmax.f32 %v787, %v788
    %v790 = vsel %vm214, %v740, -inf
    %v791 = vrot.slane %v790, 4
    %v792 = vmax.f32 %v790, %v791
    %v793 = vrot.slane %v792, 2
    %v794 = vmax.f32 %v792, %v793
    %v795 = vrot.slane %v794, 1
    %v796 = vmax.f32 %v794, %v795
    %v797 = vsub.f32 %v733, %v747
    %v798 = vsub.f32 %v734, %v754
    %v799 = vsub.f32 %v735, %v761
    %v800 = vsub.f32 %v736, %v768
    %v801 = vsub.f32 %v737, %v775
    %v802 = vsub.f32 %v738, %v782
    %v803 = vsub.f32 %v739, %v789
    %v804 = vsub.f32 %v740, %v796
    %v805 = vmul.f32 %v797, 1.442695
    %v806 = vpow.pop %v805
    %v807 = vmul.f32 %v798, 1.442695
    %v808 = vpow.pop %v807
    %v809 = vmul.f32 %v799, 1.442695
    %v810 = vpow.pop %v809
    %v811 = vmul.f32 %v800, 1.442695
    %v812 = vpow.pop %v811
    %v813 = vmul.f32 %v801, 1.442695
    %v814 = vpow.pop %v813
    %v815 = vmul.f32 %v802, 1.442695
    %v816 = vpow.pop %v815
    %v817 = vmul.f32 %v803, 1.442695
    %v818 = vpow.pop %v817
    %v819 = vmul.f32 %v804, 1.442695
    %v820 = vpow.pop %v819
    %v821 = vsel %vm214, %v806, 0.0
    %v822 = vrot.slane %v821, 4
    %v823 = vadd.f32 %v821, %v822
    %v824 = vrot.slane %v823, 2
    %v825 = vadd.f32 %v823, %v824
    %v826 = vrot.slane %v825, 1
    %v827 = vadd.f32 %v825, %v826
    %v828 = vsel %vm214, %v808, 0.0
    %v829 = vrot.slane %v828, 4
    %v830 = vadd.f32 %v828, %v829
    %v831 = vrot.slane %v830, 2
    %v832 = vadd.f32 %v830, %v831
    %v833 = vrot.slane %v832, 1
    %v834 = vadd.f32 %v832, %v833
    %v835 = vsel %vm214, %v810, 0.0
    %v836 = vrot.slane %v835, 4
    %v837 = vadd.f32 %v835, %v836
    %v838 = vrot.slane %v837, 2
    %v839 = vadd.f32 %v837, %v838
    %v840 = vrot.slane %v839, 1
    %v841 = vadd.f32 %v839, %v840
    %v842 = vsel %vm214, %v812, 0.0
    %v843 = vrot.slane %v842, 4
    %v844 = vadd.f32 %v842, %v843
    %v845 = vrot.slane %v844, 2
    %v846 = vadd.f32 %v844, %v845
    %v847 = vrot.slane %v846, 1
    %v848 = vadd.f32 %v846, %v847
    %v849 = vsel %vm214, %v814, 0.0
    %v850 = vrot.slane %v849, 4
    %v851 = vadd.f32 %v849, %v850
    %v852 = vrot.slane %v851, 2
    %v853 = vadd.f32 %v851, %v852
    %v854 = vrot.slane %v853, 1
    %v855 = vadd.f32 %v853, %v854
    %v856 = vsel %vm214, %v816, 0.0
    %v857 = vrot.slane %v856, 4
    %v858 = vadd.f32 %v856, %v857
    %v859 = vrot.slane %v858, 2
    %v860 = vadd.f32 %v858, %v859
    %v861 = vrot.slane %v860, 1
    %v862 = vadd.f32 %v860, %v861
    %v863 = vsel %vm214, %v818, 0.0
    %v864 = vrot.slane %v863, 4
    %v865 = vadd.f32 %v863, %v864
    %v866 = vrot.slane %v865, 2
    %v867 = vadd.f32 %v865, %v866
    %v868 = vrot.slane %v867, 1
    %v869 = vadd.f32 %v867, %v868
    %v870 = vsel %vm214, %v820, 0.0
    %v871 = vrot.slane %v870, 4
    %v872 = vadd.f32 %v870, %v871
    %v873 = vrot.slane %v872, 2
    %v874 = vadd.f32 %v872, %v873
    %v875 = vrot.slane %v874, 1
    %v876 = vadd.f32 %v874, %v875
    %v877 = vrcp.pop %v827
    %v878 = vmul.f32 %v827, %v877
    %v879 = vsub.f32 1.0, %v878
    %v880 = vmul.f32 %v877, %v879
    %v881 = vadd.f32 %v877, %v880
    %vm882 = vweird.f32 %v827
    %vm883 = vweird.f32 %v877
    %vm884 = vmor %vm882, %vm883
    %v885 = vsel %vm884, %v877, %v881
    %v886 = vand.u32 2147483647, %v827
    %vm887 = vcmp.eq.f32.partialorder %v886, 8.507059e+37
    %v888 = vand.u32 %v827, 2147483648
    %v889 = vor.u32 1.1754944e-38, %v888
    %v890 = vsel %vm887, %v889, %v885
    %v891 = vmul.f32 %v806, %v890
    %v892 = vrcp.pop %v834
    %v893 = vmul.f32 %v834, %v892
    %v894 = vsub.f32 1.0, %v893
    %v895 = vmul.f32 %v892, %v894
    %v896 = vadd.f32 %v892, %v895
    %vm897 = vweird.f32 %v834
    %vm898 = vweird.f32 %v892
    %vm899 = vmor %vm897, %vm898
    %v900 = vsel %vm899, %v892, %v896
    %v901 = vand.u32 2147483647, %v834
    %vm902 = vcmp.eq.f32.partialorder %v901, 8.507059e+37
    %v903 = vand.u32 %v834, 2147483648
    %v904 = vor.u32 1.1754944e-38, %v903
    %v905 = vsel %vm902, %v904, %v900
    %v906 = vmul.f32 %v808, %v905
    %v907 = vrcp.pop %v841
    %v908 = vmul.f32 %v841, %v907
    %v909 = vsub.f32 1.0, %v908
    %v910 = vmul.f32 %v907, %v909
    %v911 = vadd.f32 %v907, %v910
    %vm912 = vweird.f32 %v841
    %vm913 = vweird.f32 %v907
    %vm914 = vmor %vm912, %vm913
    %v915 = vsel %vm914, %v907, %v911
    %v916 = vand.u32 2147483647, %v841
    %vm917 = vcmp.eq.f32.partialorder %v916, 8.507059e+37
    %v918 = vand.u32 %v841, 2147483648
    %v919 = vor.u32 1.1754944e-38, %v918
    %v920 = vsel %vm917, %v919, %v915
    %v921 = vmul.f32 %v810, %v920
    %v922 = vrcp.pop %v848
    %v923 = vmul.f32 %v848, %v922
    %v924 = vsub.f32 1.0, %v923
    %v925 = vmul.f32 %v922, %v924
    %v926 = vadd.f32 %v922, %v925
    %vm927 = vweird.f32 %v848
    %vm928 = vweird.f32 %v922
    %vm929 = vmor %vm927, %vm928
    %v930 = vsel %vm929, %v922, %v926
    %v931 = vand.u32 2147483647, %v848
    %vm932 = vcmp.eq.f32.partialorder %v931, 8.507059e+37
    %v933 = vand.u32 %v848, 2147483648
    %v934 = vor.u32 1.1754944e-38, %v933
    %v935 = vsel %vm932, %v934, %v930
    %v936 = vmul.f32 %v812, %v935
    %v937 = vrcp.pop %v855
    %v938 = vmul.f32 %v855, %v937
    %v939 = vsub.f32 1.0, %v938
    %v940 = vmul.f32 %v937, %v939
    %v941 = vadd.f32 %v937, %v940
    %vm942 = vweird.f32 %v855
    %vm943 = vweird.f32 %v937
    %vm944 = vmor %vm942, %vm943
    %v945 = vsel %vm944, %v937, %v941
    %v946 = vand.u32 2147483647, %v855
    %vm947 = vcmp.eq.f32.partialorder %v946, 8.507059e+37
    %v948 = vand.u32 %v855, 2147483648
    %v949 = vor.u32 1.1754944e-38, %v948
    %v950 = vsel %vm947, %v949, %v945
    %v951 = vmul.f32 %v814, %v950
    %v952 = vrcp.pop %v862
    %v953 = vmul.f32 %v862, %v952
    %v954 = vsub.f32 1.0, %v953
    %v955 = vmul.f32 %v952, %v954
    %v956 = vadd.f32 %v952, %v955
    %vm957 = vweird.f32 %v862
    %vm958 = vweird.f32 %v952
    %vm959 = vmor %vm957, %vm958
    %v960 = vsel %vm959, %v952, %v956
    %v961 = vand.u32 2147483647, %v862
    %vm962 = vcmp.eq.f32.partialorder %v961, 8.507059e+37
    %v963 = vand.u32 %v862, 2147483648
    %v964 = vor.u32 1.1754944e-38, %v963
    %v965 = vsel %vm962, %v964, %v960
    %v966 = vmul.f32 %v816, %v965
    %v967 = vrcp.pop %v869
    %v968 = vmul.f32 %v869, %v967
    %v969 = vsub.f32 1.0, %v968
    %v970 = vmul.f32 %v967, %v969
    %v971 = vadd.f32 %v967, %v970
    %vm972 = vweird.f32 %v869
    %vm973 = vweird.f32 %v967
    %vm974 = vmor %vm972, %vm973
    %v975 = vsel %vm974, %v967, %v971
    %v976 = vand.u32 2147483647, %v869
    %vm977 = vcmp.eq.f32.partialorder %v976, 8.507059e+37
    %v978 = vand.u32 %v869, 2147483648
    %v979 = vor.u32 1.1754944e-38, %v978
    %v980 = vsel %vm977, %v979, %v975
    %v981 = vmul.f32 %v818, %v980
    %v982 = vrcp.pop %v876
    %v983 = vmul.f32 %v876, %v982
    %v984 = vsub.f32 1.0, %v983
    %v985 = vmul.f32 %v982, %v984
    %v986 = vadd.f32 %v982, %v985
    %vm987 = vweird.f32 %v876
    %vm988 = vweird.f32 %v982
    %vm989 = vmor %vm987, %vm988
    %v990 = vsel %vm989, %v982, %v986
    %v991 = vand.u32 2147483647, %v876
    %vm992 = vcmp.eq.f32.partialorder %v991, 8.507059e+37
    %v993 = vand.u32 %v876, 2147483648
    %v994 = vor.u32 1.1754944e-38, %v993
    %v995 = vsel %vm992, %v994, %v990
    %v996 = vmul.f32 %v820, %v995
    %v997 = vunpack.c.l.bf16 %v583
    %v998 = vunpack.c.l.bf16 %v584
    %v999 = vunpack.c.l.bf16 %v585
    %v1000 = vunpack.c.l.bf16 %v586
    %v1001 = vunpack.c.l.bf16 %v587
    %v1002 = vunpack.c.l.bf16 %v588
    %v1003 = vunpack.c.l.bf16 %v589
    %v1004 = vunpack.c.l.bf16 %v590
    %1006 = vset.pattern.permute.xlu0 0
    %1007 = vperm.xlu0 %1006, %v891
    %v1008 = vpop.permute.xlu0 %1007
    %1011 = vset.pattern.permute.xlu0 0
    %1012 = vperm.xlu0 %1011, %v906
    %v1013 = vpop.permute.xlu0 %1012
    %1016 = vset.pattern.permute.xlu0 0
    %1017 = vperm.xlu0 %1016, %v921
    %v1018 = vpop.permute.xlu0 %1017
    %1021 = vset.pattern.permute.xlu0 0
    %1022 = vperm.xlu0 %1021, %v936
    %v1023 = vpop.permute.xlu0 %1022
    %1026 = vset.pattern.permute.xlu0 0
    %1027 = vperm.xlu0 %1026, %v951
    %v1028 = vpop.permute.xlu0 %1027
    %1031 = vset.pattern.permute.xlu0 0
    %1032 = vperm.xlu0 %1031, %v966
    %v1033 = vpop.permute.xlu0 %1032
    %1036 = vset.pattern.permute.xlu0 0
    %1037 = vperm.xlu0 %1036, %v981
    %v1038 = vpop.permute.xlu0 %1037
    %1041 = vset.pattern.permute.xlu0 0
    %1042 = vperm.xlu0 %1041, %v996
    %v1043 = vpop.permute.xlu0 %1042
    %v1045 = vmul.f32 %v997, %v1008
    %v1046 = vmul.f32 %v998, %v1013
    %v1047 = vmul.f32 %v999, %v1018
    %v1048 = vmul.f32 %v1000, %v1023
    %v1049 = vmul.f32 %v1001, %v1028
    %v1050 = vmul.f32 %v1002, %v1033
    %v1051 = vmul.f32 %v1003, %v1038
    %v1052 = vmul.f32 %v1004, %v1043
    %v1053 = vsel %vm83, %v1045, 0.0
    %v1054 = vrot.slane %v1053, 4
    %v1055 = vadd.f32 %v1053, %v1054
    %v1056 = vrot.slane %v1055, 2
    %v1057 = vadd.f32 %v1055, %v1056
    %v1058 = vrot.slane %v1057, 1
    %v1059 = vadd.f32 %v1057, %v1058
    %v1060 = vsel %vm83, %v1046, 0.0
    %v1061 = vrot.slane %v1060, 4
    %v1062 = vadd.f32 %v1060, %v1061
    %v1063 = vrot.slane %v1062, 2
    %v1064 = vadd.f32 %v1062, %v1063
    %v1065 = vrot.slane %v1064, 1
    %v1066 = vadd.f32 %v1064, %v1065
    %v1067 = vsel %vm83, %v1047, 0.0
    %v1068 = vrot.slane %v1067, 4
    %v1069 = vadd.f32 %v1067, %v1068
    %v1070 = vrot.slane %v1069, 2
    %v1071 = vadd.f32 %v1069, %v1070
    %v1072 = vrot.slane %v1071, 1
    %v1073 = vadd.f32 %v1071, %v1072
    %v1074 = vsel %vm83, %v1048, 0.0
    %v1075 = vrot.slane %v1074, 4
    %v1076 = vadd.f32 %v1074, %v1075
    %v1077 = vrot.slane %v1076, 2
    %v1078 = vadd.f32 %v1076, %v1077
    %v1079 = vrot.slane %v1078, 1
    %v1080 = vadd.f32 %v1078, %v1079
    %v1081 = vsel %vm83, %v1049, 0.0
    %v1082 = vrot.slane %v1081, 4
    %v1083 = vadd.f32 %v1081, %v1082
    %v1084 = vrot.slane %v1083, 2
    %v1085 = vadd.f32 %v1083, %v1084
    %v1086 = vrot.slane %v1085, 1
    %v1087 = vadd.f32 %v1085, %v1086
    %v1088 = vsel %vm83, %v1050, 0.0
    %v1089 = vrot.slane %v1088, 4
    %v1090 = vadd.f32 %v1088, %v1089
    %v1091 = vrot.slane %v1090, 2
    %v1092 = vadd.f32 %v1090, %v1091
    %v1093 = vrot.slane %v1092, 1
    %v1094 = vadd.f32 %v1092, %v1093
    %v1095 = vsel %vm83, %v1051, 0.0
    %v1096 = vrot.slane %v1095, 4
    %v1097 = vadd.f32 %v1095, %v1096
    %v1098 = vrot.slane %v1097, 2
    %v1099 = vadd.f32 %v1097, %v1098
    %v1100 = vrot.slane %v1099, 1
    %v1101 = vadd.f32 %v1099, %v1100
    %v1102 = vsel %vm83, %v1052, 0.0
    %v1103 = vrot.slane %v1102, 4
    %v1104 = vadd.f32 %v1102, %v1103
    %v1105 = vrot.slane %v1104, 2
    %v1106 = vadd.f32 %v1104, %v1105
    %v1107 = vrot.slane %v1106, 1
    %v1108 = vadd.f32 %v1106, %v1107
    %v1109 = vld [vmem:[%s0] sm:$0xf]
    %v1110 = vunpack.c.l.bf16 %v1109
    %vm1119 = vcmask 1041409
    %v1120 = vsel %vm1119, %v540, %v533
    %vm1121 = vcmask 1042434
    %v1122 = vsel %vm1121, %v547, %v1120
    %vm1123 = vcmask 1043459
    %v1124 = vsel %vm1123, %v554, %v1122
    %vm1125 = vcmask 1044484
    %v1126 = vsel %vm1125, %v561, %v1124
    %vm1127 = vcmask 1045509
    %v1128 = vsel %vm1127, %v568, %v1126
    %vm1129 = vcmask 1046534
    %v1130 = vsel %vm1129, %v575, %v1128
    %vm1131 = vcmask 1047559
    %v1132 = vsel %vm1131, %v582, %v1130
    %v1134 = vmul.f32 %v1110, %v1132
    %v1135 = vsel %vm83, %v1134, 0.0
    %1136 = vadd.xlane.f32.xlu0 %v1135
    %v1137 = vpop.xlane.xlu0 %1136
    %v1146 = vsel %vm1119, %v1066, %v1059
    %v1147 = vsel %vm1121, %v1073, %v1146
    %v1148 = vsel %vm1123, %v1080, %v1147
    %v1149 = vsel %vm1125, %v1087, %v1148
    %v1150 = vsel %vm1127, %v1094, %v1149
    %v1151 = vsel %vm1129, %v1101, %v1150
    %v1152 = vsel %vm1131, %v1108, %v1151
    %v1154 = vmul.f32 %v1110, %v1152
    %v1155 = vsel %vm83, %v1154, 0.0
    %1156 = vadd.xlane.f32.xlu0 %v1155
    %v1157 = vpop.xlane.xlu0 %1156
    %v1158 = vsub.f32 %v1157, %v1137
    %v1159 = vmax.f32 %v1158, 0.0
    %v1160 = vand.u32 2147483647, %v1158
    %v1161 = vsub.f32 0.0, %v1160
    %v1162 = vmul.f32 %v1161, 1.442695
    %v1163 = vpow.pop %v1162
    %v1164 = vadd.f32 %v1163, 1.0
    %v1165 = vlog2.pop %v1164
    %v1166 = vmul.f32 %v1165, 0.6931472
    %v1167 = vmul.f32 -0.5, %v1163
    %v1168 = vadd.f32 %v1167, 1.0
    %v1169 = vmul.f32 %v1168, %v1163
    %v1170 = vand.u32 2147483647, %v1163
    %vm1171 = vcmp.lt.f32.partialorder %v1170, 0.0004427343
    %v1172 = vsel %vm1171, %v1169, %v1166
    %v1173 = vadd.f32 %v1159, %v1172
    %v1175 = vlaneseq
    %v1176 = vand.u32 %v1175, 127
    %v1177 = vperm.slane %v1173, %v1176
    %vm1179 = vcmask 57344
    %1180 = vst.msk [vmem:[#allocation2] sm:$0x1] %vm1179, %v1177
    // Predicated region
    $region34: #{tpu_custom_call.1} parent=1 // pred_check
      _
    $region35: #{tpu_custom_call.1} parent=1 // pred_check_branch
      %1182 = sbr.rel (0) target = $region37
    $region36: #{tpu_custom_call.1} parent=1 // pred_region
      %1184 = vsyncadd [#allocation3], 0
      %s1186 = sshll.u32 [#allocation2], 4
      %s1187 = int_to_ptr.vmem [resolvable:$true] %s1186
      %s1188 = sshll.u32 %s8, 4
      %s1189 = int_to_ptr.hbm [resolvable:$true] %s1188
      %1191 = dma.vmem_to_hbm [thread:$0]  %s1187, 16, %s1189, [#allocation3]
    $region37: #{tpu_custom_call.1} parent=1 // pred_fallthru
      _
    // Predicated region
    $region38: #{tpu_custom_call.1} parent=1 // pred_check
      _
    $region39: #{tpu_custom_call.1} parent=1 // pred_check_branch
      %1193 = sbr.rel (0) target = $region41
    $region40: #{tpu_custom_call.1} parent=1 // pred_region
      %1195 = dma.done [#allocation3], 16
    $region41: #{tpu_custom_call.1} parent=1 // pred_fallthru
      _
    %1196 = vsyncpa [#allocation3], 1

</llo_original>
